<compile_context>
chip_gen: v7x
topology: tpu7x:2x2x1
jax: 0.10.0
libtpu: 0.0.40
codegen_flags: <defaults>
</compile_context>

<pallas_src>
import functools

import jax
import jax.numpy as jnp
from jax import lax
from jax.experimental import pallas as pl
from jax.experimental.pallas import tpu as pltpu


def _round_up(x, m):
    return ((x + m - 1) // m) * m


def _channel_exchange_kernel(x1_ref, x2_ref, o1_ref, o2_ref, *, p, C, tm):
    # Block shape is (tm, tn); rows are flattened (batch, channel) indices.
    x1 = x1_ref[...]
    x2 = x2_ref[...]

    # Narrow (tm, 1) mask; broadcasts over the lane axis in jnp.where.
    row0 = pl.program_id(0) * tm
    rows = row0 + lax.broadcasted_iota(jnp.int32, (tm, 1), dimension=0)
    ch = rows % C
    if p & (p - 1) == 0:  # power of two (default p=2): cheap bitwise test
        exchange = (ch & (p - 1)) == 0
    else:
        exchange = (ch % p) == 0

    # Where exchange: out1 takes x2, out2 takes x1. Otherwise pass-through.
    o1_ref[...] = jnp.where(exchange, x2, x1)
    o2_ref[...] = jnp.where(exchange, x1, x2)


def channel_exchange(x1, x2, p_frac=0.5, *, donate_inputs=False):
    """x1, x2: (N, C, H, W) arrays (same shape/dtype). Returns (out1, out2).

    Set donate_inputs=True only if x1/x2 are dead after this call; it enables
    input_output_aliases so no fresh HBM output buffers are allocated.
    """
    assert x1.shape == x2.shape and x1.dtype == x2.dtype
    p = int(1 / p_frac)  # matches PyTorch: self.p = int(1 / p)
    N, C, H, W = x1.shape
    HW = H * W
    R = N * C
    itemsize = jnp.dtype(x1.dtype).itemsize

    # Flatten to (rows, lanes): rows = N*C (sublane axis), lanes = H*W.
    x1f = x1.reshape(R, HW)
    x2f = x2.reshape(R, HW)

    # Tile selection: fixed-size, sublane-full rows and lane-dense columns.
    row_align = 8 if itemsize >= 4 else (16 if itemsize == 2 else 32)
    tm = 256 if R >= 256 else _round_up(R, row_align)
    tn = 512 if HW >= 512 else _round_up(HW, 128)
    R_pad = _round_up(R, tm)
    HW_pad = _round_up(HW, tn)

    if (R_pad, HW_pad) != (R, HW):
        # Layout plumbing only: guarantees full, unmasked vector stores.
        x1f = jnp.pad(x1f, ((0, R_pad - R), (0, HW_pad - HW)))
        x2f = jnp.pad(x2f, ((0, R_pad - R), (0, HW_pad - HW)))

    grid = (R_pad // tm, HW_pad // tn)
    spec = pl.BlockSpec((tm, tn), lambda i, j: (i, j))

    cost = pl.CostEstimate(
        flops=0,
        transcendentals=0,
        bytes_accessed=4 * R_pad * HW_pad * itemsize,
    )

    extra_kwargs = {}
    if donate_inputs:
        extra_kwargs["input_output_aliases"] = {0: 0, 1: 1}

    out1, out2 = pl.pallas_call(
        functools.partial(_channel_exchange_kernel, p=p, C=C, tm=tm),
        out_shape=(
            jax.ShapeDtypeStruct((R_pad, HW_pad), x1.dtype),
            jax.ShapeDtypeStruct((R_pad, HW_pad), x2.dtype),
        ),
        grid_spec=pltpu.PrefetchScalarGridSpec(
            num_scalar_prefetch=0,
            grid=grid,
            in_specs=[spec, spec],
            out_specs=[spec, spec],
        ),
        compiler_params=pltpu.CompilerParams(
            dimension_semantics=("parallel", "parallel")
        ),
        cost_estimate=cost,
        **extra_kwargs,
    )(x1f, x2f)

    out1 = out1[:R, :HW].reshape(N, C, H, W)
    out2 = out2[:R, :HW].reshape(N, C, H, W)
    return out1, out2


if __name__ == "__main__":
    key = jax.random.PRNGKey(0)
    k1, k2 = jax.random.split(key)
    N, C, H, W = 2, 4, 16, 16
    x1 = jax.random.normal(k1, (N, C, H, W), dtype=jnp.float32)
    x2 = jax.random.normal(k2, (N, C, H, W), dtype=jnp.float32)

    out1, out2 = channel_exchange(x1, x2, p_frac=0.5)
    jax.block_until_ready((out1, out2))

    # Pure-JAX reference check (p = 2 -> channels 0, 2 swapped).
    p = 2
    ch_mask = (jnp.arange(C) % p == 0)[None, :, None, None]
    ref1 = jnp.where(ch_mask, x2, x1)
    ref2 = jnp.where(ch_mask, x1, x2)
    assert jnp.allclose(out1, ref1) and jnp.allclose(out2, ref2)

    # Also exercise a padded / larger case (HW not a multiple of 128).
    N2, C2, H2, W2 = 2, 6, 14, 14
    y1 = jax.random.normal(k1, (N2, C2, H2, W2), dtype=jnp.float32)
    y2 = jax.random.normal(k2, (N2, C2, H2, W2), dtype=jnp.float32)
    o1, o2 = channel_exchange(y1, y2, p_frac=0.5)
    jax.block_until_ready((o1, o2))
    m2 = (jnp.arange(C2) % p == 0)[None, :, None, None]
    assert jnp.allclose(o1, jnp.where(m2, y2, y1))
    assert jnp.allclose(o2, jnp.where(m2, y1, y2))

    print("KERNEL_OK")
</pallas_src>

<mosaic_0001>
module attributes {stable_mosaic.version = 11 : i64} {
  func.func @_channel_exchange_kernel(%arg0: i32, %arg1: i32, %arg2: memref<8x256xf32, #tpu.memory_space<vmem>>, %arg3: memref<8x256xf32, #tpu.memory_space<vmem>>, %arg4: memref<8x256xf32, #tpu.memory_space<vmem>>, %arg5: memref<8x256xf32, #tpu.memory_space<vmem>>) attributes {dimension_semantics = [#tpu.dimension_semantics<parallel>, #tpu.dimension_semantics<parallel>], iteration_bounds = array<i64: 1, 1>, scalar_prefetch = 0 : i64, scratch_operands = 0 : i64, tpu.core_type = #tpu.core_type<tc>, window_params = [{transform_indices = @transform_0, window_bounds = array<i64: 8, 256>}, {transform_indices = @transform_1, window_bounds = array<i64: 8, 256>}, {transform_indices = @transform_2, window_bounds = array<i64: 8, 256>}, {transform_indices = @transform_3, window_bounds = array<i64: 8, 256>}]} {
    %c0 = arith.constant 0 : index
    %c0_0 = arith.constant 0 : index
    %0 = vector.load %arg2[%c0, %c0_0] : memref<8x256xf32, #tpu.memory_space<vmem>>, vector<8x256xf32>
    %c0_1 = arith.constant 0 : index
    %c0_2 = arith.constant 0 : index
    %1 = vector.load %arg3[%c0_1, %c0_2] : memref<8x256xf32, #tpu.memory_space<vmem>>, vector<8x256xf32>
    %c8_i32 = arith.constant 8 : i32
    %2 = arith.muli %arg0, %c8_i32 : i32
    %3 = tpu.iota {dimensions = array<i32: 0>} : vector<8x1xi32>
    %4 = vector.broadcast %2 : i32 to vector<8x1xi32>
    %5 = arith.addi %4, %3 : vector<8x1xi32>
    %c4_i32 = arith.constant 4 : i32
    %c0_i32 = arith.constant 0 : i32
    %6 = arith.cmpi eq, %c4_i32, %c0_i32 : i32
    %c1_i32 = arith.constant 1 : i32
    %7 = arith.select %6, %c1_i32, %c4_i32 : i32
    %8 = vector.broadcast %7 : i32 to vector<8x1xi32>
    %9 = arith.remsi %5, %8 : vector<8x1xi32>
    %c0_i32_3 = arith.constant 0 : i32
    %10 = vector.broadcast %c0_i32_3 : i32 to vector<8x1xi32>
    %11 = arith.cmpi ne, %9, %10 : vector<8x1xi32>
    %c0_i32_4 = arith.constant 0 : i32
    %12 = vector.broadcast %c0_i32_4 : i32 to vector<8x1xi32>
    %13 = arith.cmpi slt, %9, %12 : vector<8x1xi32>
    %c0_i32_5 = arith.constant 0 : i32
    %14 = arith.cmpi slt, %7, %c0_i32_5 : i32
    %15 = vector.broadcast %14 : i1 to vector<8x1xi1>
    %16 = vector.broadcast %15 : vector<8x1xi1> to vector<8x1xi1>
    %17 = arith.xori %13, %16 : vector<8x1xi1>
    %18 = arith.andi %17, %11 : vector<8x1xi1>
    %19 = vector.broadcast %7 : i32 to vector<8x1xi32>
    %20 = arith.addi %9, %19 : vector<8x1xi32>
    %21 = arith.select %18, %20, %9 : vector<8x1xi1>, vector<8x1xi32>
    %c1_i32_6 = arith.constant 1 : i32
    %22 = vector.broadcast %c1_i32_6 : i32 to vector<8x1xi32>
    %23 = arith.andi %21, %22 : vector<8x1xi32>
    %c0_i32_7 = arith.constant 0 : i32
    %24 = vector.broadcast %c0_i32_7 : i32 to vector<8x1xi32>
    %25 = arith.cmpi eq, %23, %24 : vector<8x1xi32>
    %26 = vector.shape_cast %25 : vector<8x1xi1> to vector<8x1xi1>
    %27 = vector.broadcast %26 : vector<8x1xi1> to vector<8x256xi1>
    %28 = arith.select %27, %1, %0 : vector<8x256xi1>, vector<8x256xf32>
    %c0_8 = arith.constant 0 : index
    %c0_9 = arith.constant 0 : index
    %29 = vector.load %arg4[%c0_8, %c0_9] : memref<8x256xf32, #tpu.memory_space<vmem>>, vector<8x256xf32>
    tpu.vector_store %arg4[%c0_8, %c0_9], %28 {strides = array<i32>} : memref<8x256xf32, #tpu.memory_space<vmem>>, vector<8x256xf32>,
    %30 = vector.shape_cast %25 : vector<8x1xi1> to vector<8x1xi1>
    %31 = vector.broadcast %30 : vector<8x1xi1> to vector<8x256xi1>
    %32 = arith.select %31, %0, %1 : vector<8x256xi1>, vector<8x256xf32>
    %c0_10 = arith.constant 0 : index
    %c0_11 = arith.constant 0 : index
    %33 = vector.load %arg5[%c0_10, %c0_11] : memref<8x256xf32, #tpu.memory_space<vmem>>, vector<8x256xf32>
    tpu.vector_store %arg5[%c0_10, %c0_11], %32 {strides = array<i32>} : memref<8x256xf32, #tpu.memory_space<vmem>>, vector<8x256xf32>,
    return
  }
  func.func @transform_0(%arg0: i32, %arg1: i32) -> (i32, i32) {
    %c0_i32 = arith.constant 0 : i32
    return %arg0, %arg1 : i32, i32
  }
  func.func @transform_1(%arg0: i32, %arg1: i32) -> (i32, i32) {
    %c0_i32 = arith.constant 0 : i32
    return %arg0, %arg1 : i32, i32
  }
  func.func @transform_2(%arg0: i32, %arg1: i32) -> (i32, i32) {
    %c0_i32 = arith.constant 0 : i32
    return %arg0, %arg1 : i32, i32
  }
  func.func @transform_3(%arg0: i32, %arg1: i32) -> (i32, i32) {
    %c0_i32 = arith.constant 0 : i32
    return %arg0, %arg1 : i32, i32
  }
}

</mosaic_0001>

<llo_original>
// kernel: tpu_custom_call.1
$region0: #{tpu_custom_call.1}
  #allocation0 [shape = 'u32[]', space=smem, size = 0x4, offset = 0x4, fixed_abs, tag = 'smem constant byte address 0x4 - core index']
  #allocation1 [shape = 'u32[144,128]{1,0:T(1,128)}', space=vmem, size = 0x12000, scoped, tag = 'internal scratch']
  %s0 = inlined_call_operand.hbm [shape: f32[8,256], index: 0, kind: input, shape index: {}]
  %s1 = inlined_call_operand.hbm [shape: f32[8,256], index: 1, kind: input, shape index: {}]
  %s2 = inlined_call_operand.hbm [shape: f32[8,256], index: 2, kind: output, shape index: {0}]
  %s3 = inlined_call_operand.hbm [shape: f32[8,256], index: 3, kind: output, shape index: {1}]
  %4 = xla_tuple %s2, %s3
  %s5 = sld [smem:[#allocation0]]
  $region34: #{tpu_custom_call.1} parent=0
    _
  %s7 = ssub.s32 1, %s5
  %s8 = scalar_select 0, %s7, %s5
  $region1: #{tpu_custom_call.1} parent=0
    #allocation2 [shape = 'u8[8192]{0}', space=vmem, size = 0x2000, scoped, tag = 'input window, operand 0, single buffered']
    #allocation3 [shape = 's32[1]{0}', space=sflag, size = 0x4, scoped, tag = 'scoped memory for tpu_custom_call.1']
    #allocation4 [shape = 's32[1]{0}', space=sflag, size = 0x4, scoped, tag = 'scoped memory for tpu_custom_call.1']
    #allocation5 [shape = 'u8[8192]{0}', space=vmem, size = 0x2000, scoped, tag = 'input window, operand 1, single buffered']
    #allocation6 [shape = 's32[1]{0}', space=sflag, size = 0x4, scoped, tag = 'scoped memory for tpu_custom_call.1']
    #allocation7 [shape = 'u8[8192]{0}', space=vmem, size = 0x2000, scoped, tag = 'output window, operand 0, single buffered']
    #allocation8 [shape = 'u8[8192]{0}', space=vmem, size = 0x2000, scoped, tag = 'output window, operand 1, single buffered']
    #allocation9 [shape = 's32[1]{0}', space=sflag, size = 0x4, scoped, tag = 'scoped memory for tpu_custom_call.1']
    %9 = vsyncpa [#allocation3], 0
    %10 = vsyncpa [#allocation6], 0
    %11 = vsyncpa [#allocation4], 0
    %12 = vsyncpa [#allocation9], 0
    // Predicated region
    $region2: #{tpu_custom_call.1} parent=1 // pred_check
      _
    $region3: #{tpu_custom_call.1} parent=1 // pred_check_branch
      %14 = sbr.rel (0) target = $region5
    $region4: #{tpu_custom_call.1} parent=1 // pred_region
      %s16 = ssub.s32 256, 256
      %17 = vsyncadd [#allocation3], %s16
      %s19 = sshll.u32 [#allocation2], 4
      %s20 = int_to_ptr.vmem [resolvable:$true] %s19
      %22 = dma.hbm_to_vmem [thread:$0]  %s0, 256, %s20, [#allocation3]
    $region5: #{tpu_custom_call.1} parent=1 // pred_fallthru
      _
    // Predicated region
    $region6: #{tpu_custom_call.1} parent=1 // pred_check
      _
    $region7: #{tpu_custom_call.1} parent=1 // pred_check_branch
      %24 = sbr.rel (0) target = $region9
    $region8: #{tpu_custom_call.1} parent=1 // pred_region
      %s26 = ssub.s32 256, 256
      %27 = vsyncadd [#allocation6], %s26
      %s29 = sshll.u32 [#allocation5], 4
      %s30 = int_to_ptr.vmem [resolvable:$true] %s29
      %32 = dma.hbm_to_vmem [thread:$0]  %s1, 256, %s30, [#allocation6]
    $region9: #{tpu_custom_call.1} parent=1 // pred_fallthru
      _
    // Predicated region
    $region10: #{tpu_custom_call.1} parent=1 // pred_check
      _
    $region11: #{tpu_custom_call.1} parent=1 // pred_check_branch
      %34 = sbr.rel (0) target = $region13
    $region12: #{tpu_custom_call.1} parent=1 // pred_region
      %35 = dma.done [#allocation3], 256
    $region13: #{tpu_custom_call.1} parent=1 // pred_fallthru
      _
    // Predicated region
    $region14: #{tpu_custom_call.1} parent=1 // pred_check
      _
    $region15: #{tpu_custom_call.1} parent=1 // pred_check_branch
      %37 = sbr.rel (0) target = $region17
    $region16: #{tpu_custom_call.1} parent=1 // pred_region
      %38 = dma.done [#allocation6], 256
    $region17: #{tpu_custom_call.1} parent=1 // pred_fallthru
      _
    %v39 = vld [vmem:[#allocation2] sm:$0xff]
    %v40 = vld [vmem:[#allocation2 + $0x8] sm:$0xff]
    %v41 = vld [vmem:[#allocation5] sm:$0xff]
    %v42 = vld [vmem:[#allocation5 + $0x8] sm:$0xff]
    %s43 = smul.u32 0, 8
    %v44 = vlaneseq
    %v45 = vshrl.u32 %v44, 7
    %v46 = vstv %s43
    %v47 = vadd.s32 %v46, %v45
    %vm48 = vcmp.lt.s32.totalorder %v47, 0
    %v49 = vsub.s32 0, %v47
    %v50 = vsel %vm48, %v49, %v47
    %v51 = vshrl.u32 %v50, 2
    %v52 = vand.u32 %v50, 3
    %v53 = vsub.s32 0, %v52
    %v54 = vsel %vm48, %v53, %v52
    %vm55 = vcmp.ne.s32.totalorder %v54, 0
    %vm56 = vcmp.lt.s32.totalorder %v54, 0
    %vm57 = vmand %vm56, %vm55
    %v58 = vadd.s32 %v54, 4
    %v59 = vsel %vm57, %v58, %v54
    %v60 = vand.u32 %v59, 1
    %vm61 = vcmp.eq.s32.totalorder %v60, 0
    %v62 = vsel %vm61, 1, 0
    %vm63 = vcmp.eq.s32.totalorder %v62, 1
    %v64 = vsel %vm63, %v41, %v39
    %v65 = vsel %vm63, %v42, %v40
    %66 = vst [vmem:[#allocation7] sm:$0xff] %v64
    %67 = vst [vmem:[#allocation7 + $0x8] sm:$0xff] %v65
    %v68 = vsel %vm63, %v39, %v41
    %v69 = vsel %vm63, %v40, %v42
    %70 = vst [vmem:[#allocation8] sm:$0xff] %v68
    %71 = vst [vmem:[#allocation8 + $0x8] sm:$0xff] %v69
    // Predicated region
    $region18: #{tpu_custom_call.1} parent=1 // pred_check
      _
    $region19: #{tpu_custom_call.1} parent=1 // pred_check_branch
      %73 = sbr.rel (0) target = $region21
    $region20: #{tpu_custom_call.1} parent=1 // pred_region
      %s75 = ssub.s32 256, 256
      %76 = vsyncadd [#allocation4], %s75
      %s78 = sshll.u32 [#allocation7], 4
      %s79 = int_to_ptr.vmem [resolvable:$true] %s78
      %81 = dma.vmem_to_hbm [thread:$0]  %s79, 256, %s2, [#allocation4]
    $region21: #{tpu_custom_call.1} parent=1 // pred_fallthru
      _
    // Predicated region
    $region22: #{tpu_custom_call.1} parent=1 // pred_check
      _
    $region23: #{tpu_custom_call.1} parent=1 // pred_check_branch
      %83 = sbr.rel (0) target = $region25
    $region24: #{tpu_custom_call.1} parent=1 // pred_region
      %s85 = ssub.s32 256, 256
      %86 = vsyncadd [#allocation9], %s85
      %s88 = sshll.u32 [#allocation8], 4
      %s89 = int_to_ptr.vmem [resolvable:$true] %s88
      %91 = dma.vmem_to_hbm [thread:$0]  %s89, 256, %s3, [#allocation9]
    $region25: #{tpu_custom_call.1} parent=1 // pred_fallthru
      _
    // Predicated region
    $region26: #{tpu_custom_call.1} parent=1 // pred_check
      _
    $region27: #{tpu_custom_call.1} parent=1 // pred_check_branch
      %93 = sbr.rel (0) target = $region29
    $region28: #{tpu_custom_call.1} parent=1 // pred_region
      %94 = dma.done [#allocation4], 256
    $region29: #{tpu_custom_call.1} parent=1 // pred_fallthru
      _
    // Predicated region
    $region30: #{tpu_custom_call.1} parent=1 // pred_check
      _
    $region31: #{tpu_custom_call.1} parent=1 // pred_check_branch
      %96 = sbr.rel (0) target = $region33
    $region32: #{tpu_custom_call.1} parent=1 // pred_region
      %97 = dma.done [#allocation9], 256
    $region33: #{tpu_custom_call.1} parent=1 // pred_fallthru
      _
    %98 = vsyncpa [#allocation3], 1
    %99 = vsyncpa [#allocation6], 1
    %100 = vsyncpa [#allocation4], 1
    %101 = vsyncpa [#allocation9], 1

</llo_original>
